<compile_context>
chip_gen: v6e
topology: v6e:2x2x1
jax: 0.10.0
libtpu: 0.0.40
codegen_flags: <defaults>
</compile_context>

<pallas_src>
import functools

import jax
import jax.numpy as jnp
from jax.experimental import pallas as pl
from jax.experimental.pallas import tpu as pltpu

_LANE = 128
_MIB = 1024 * 1024
# Below this, kernel launch + single-step overhead dominates and XLA's fused
# clip (which also fuses into the producer) is strictly better.
_FAST_PATH_BYTES = 512 * 1024
# Minimum grid steps: lets dimension_semantics=("parallel",) shard across
# v7x's 2 TensorCores and gives the double-buffered DMA pipeline work to hide.
_MIN_GRID_STEPS = 4


def _sublane_multiple(dtype_bytes):
    # Packed-sublane granularity so edge blocks stay on natural tile bounds.
    if dtype_bytes >= 4:
        return 8
    if dtype_bytes == 2:
        return 16
    return 32


def _per_generation_config():
    """Return (target_block_bytes, vmem_limit_bytes) for this TPU generation."""
    vmem_cap = 128 * _MIB
    try:
        info = pltpu.get_tpu_info()
        vmem_cap = int(getattr(info, "vmem_capacity_bytes", vmem_cap) or vmem_cap)
    except Exception:
        pass  # unknown generation -> conservative defaults below
    if vmem_cap <= 64 * _MIB:
        # v7x-class: ~3.2 TB/s HBM but 64 MiB VMEM. Bigger tiles amortize the
        # ~0.35 us/step overhead; 2 operands x 2 buffers x 8 MiB = 32 MiB.
        return 8 * _MIB, 48 * _MIB
    # v5e / v6e: 0.8-1.4 TB/s HBM, 128 MiB VMEM; 4 MiB tiles are <5% overhead.
    return 4 * _MIB, 40 * _MIB


def _clip_fallback(x, min_val, max_val):
    """Fused XLA clip for tiny / ragged inputs (single VPU pass, no launch)."""
    # TODO(synk): integer inputs with float bounds truncate the bound to the
    # integer dtype, which differs from torch.clamp's type-promotion behavior.
    if min_val is not None:
        x = jnp.maximum(x, jnp.asarray(min_val, dtype=x.dtype))
    if max_val is not None:
        x = jnp.minimum(x, jnp.asarray(max_val, dtype=x.dtype))
    return x


def _clamp_kernel(x_ref, o_ref, *, min_val, max_val):
    x = x_ref[...]
    if min_val is not None:
        x = jnp.maximum(x, jnp.asarray(min_val, dtype=x.dtype))
    if max_val is not None:
        x = jnp.minimum(x, jnp.asarray(max_val, dtype=x.dtype))
    o_ref[...] = x


def clamp_pallas(x, min_val=None, max_val=None, *, donate_input=False):
    """Equivalent of torch.clamp(x, min=min_val, max=max_val) via Pallas TPU."""
    if min_val is None and max_val is None:
        return x  # torch.clamp with no bounds is identity

    orig_shape = x.shape
    orig_dtype = x.dtype
    n = x.size
    dtype_bytes = jnp.dtype(orig_dtype).itemsize

    # Fast path: tiny tensors are pure launch overhead in a custom call.
    if n == 0 or n * dtype_bytes < _FAST_PATH_BYTES:
        return _clip_fallback(x, min_val, max_val)

    # Ragged sizes: pad + slice would cost ~3x HBM traffic vs 1-read/1-write,
    # so the fused fallback wins on every generation.
    if n % _LANE != 0:
        return _clip_fallback(x, min_val, max_val)

    rows = n // _LANE
    x2d = jnp.ravel(x).reshape(rows, _LANE)  # contiguous reshape: free bitcast

    target_block_bytes, vmem_limit_bytes = _per_generation_config()
    sub = _sublane_multiple(dtype_bytes)

    # Largest block that fits the per-generation VMEM budget.
    max_block_rows = (target_block_bytes // (_LANE * dtype_bytes)) // sub * sub
    max_block_rows = max(max_block_rows, sub)

    if rows <= sub:
        tr = rows  # full-extent block (always legal)
    else:
        # Aim for >= _MIN_GRID_STEPS steps so both v7x TensorCores get work
        # and double-buffering can overlap DMA with compute.
        desired = pl.cdiv(pl.cdiv(rows, _MIN_GRID_STEPS), sub) * sub
        tr = min(max_block_rows, max(desired, sub))

    grid = (pl.cdiv(rows, tr),)

    kernel = functools.partial(_clamp_kernel, min_val=min_val, max_val=max_val)
    bytes_accessed = 2 * n * dtype_bytes  # one read + one write of the tensor

    out2d = pl.pallas_call(
        kernel,
        out_shape=jax.ShapeDtypeStruct((rows, _LANE), orig_dtype),
        grid_spec=pltpu.PrefetchScalarGridSpec(
            num_scalar_prefetch=0,
            grid=grid,
            in_specs=[pl.BlockSpec((tr, _LANE), lambda i: (i, 0))],
            out_specs=pl.BlockSpec((tr, _LANE), lambda i: (i, 0)),
        ),
        compiler_params=pltpu.CompilerParams(
            dimension_semantics=("parallel",),
            vmem_limit_bytes=vmem_limit_bytes,
        ),
        # Purely memory-bound: tell XLA so it can schedule around this call.
        cost_estimate=pl.CostEstimate(
            flops=n, transcendentals=0, bytes_accessed=bytes_accessed),
        # Reuse the input HBM buffer when the caller donates x (clamp is often
        # applied to an activation that is dead afterwards).
        input_output_aliases={0: 0} if donate_input else {},
    )(x2d)

    return out2d.reshape(orig_shape)


class ClampLayer:
    """JAX/Pallas mirror of the PyTorch ClampLayer."""

    def __init__(self, min=None, max=None):
        # Matches the torch module's constructor signature.
        self.min = min
        self.max = max

    def __call__(self, x):
        return clamp_pallas(x, min_val=self.min, max_val=self.max)


if __name__ == "__main__":
    key = jax.random.PRNGKey(0)
    layer = ClampLayer(min=-0.5, max=0.5)

    # Module-sized example input (tiny -> fused fast path, same semantics).
    x_small = jax.random.normal(key, (2, 4, 16, 16), dtype=jnp.float32)
    y_small = jax.block_until_ready(layer(x_small))
    assert y_small.shape == x_small.shape and y_small.dtype == x_small.dtype
    assert jnp.allclose(y_small, jnp.clip(x_small, -0.5, 0.5))

    # 128-aligned 2 MiB input: exercises the Pallas path with >= 4 grid steps.
    x_big = jax.random.normal(jax.random.PRNGKey(0), (8, 4, 128, 128),
                              dtype=jnp.float32)
    y_big = jax.block_until_ready(layer(x_big))
    assert y_big.shape == x_big.shape and y_big.dtype == x_big.dtype
    assert jnp.allclose(y_big, jnp.clip(x_big, -0.5, 0.5))

    # bf16 input: packed-sublane tile multiple (16) path.
    x_bf16 = x_big.astype(jnp.bfloat16)
    y_bf16 = jax.block_until_ready(layer(x_bf16))
    assert y_bf16.dtype == jnp.bfloat16
    assert jnp.allclose(y_bf16, jnp.clip(x_bf16, -0.5, 0.5))

    # min-only and max-only paths through the Pallas kernel.
    y_min = jax.block_until_ready(ClampLayer(min=0.0)(x_big))
    assert jnp.allclose(y_min, jnp.maximum(x_big, 0.0))
    y_max = jax.block_until_ready(ClampLayer(max=0.0)(x_big))
    assert jnp.allclose(y_max, jnp.minimum(x_big, 0.0))

    # Ragged size (not a multiple of 128 lanes) takes the fused fallback.
    x_ragged = jax.random.normal(jax.random.PRNGKey(1), (3, 5, 7),
                                 dtype=jnp.float32)
    y_ragged = jax.block_until_ready(ClampLayer(min=-0.25, max=0.25)(x_ragged))
    assert jnp.allclose(y_ragged, jnp.clip(x_ragged, -0.25, 0.25))

    print("KERNEL_OK")
</pallas_src>

<mosaic_0001>
module attributes {stable_mosaic.version = 11 : i64} {
  func.func @_clamp_kernel(%arg0: i32, %arg1: memref<1024x128xf32, #tpu.memory_space<vmem>>, %arg2: memref<1024x128xf32, #tpu.memory_space<vmem>>) attributes {dimension_semantics = [#tpu.dimension_semantics<parallel>], iteration_bounds = array<i64: 4>, scalar_prefetch = 0 : i64, scratch_operands = 0 : i64, tpu.core_type = #tpu.core_type<tc>, window_params = [{transform_indices = @transform_0, window_bounds = array<i64: 1024, 128>}, {transform_indices = @transform_1, window_bounds = array<i64: 1024, 128>}]} {
    %c0 = arith.constant 0 : index
    %c0_0 = arith.constant 0 : index
    %0 = vector.load %arg1[%c0, %c0_0] : memref<1024x128xf32, #tpu.memory_space<vmem>>, vector<1024x128xf32>
    %cst = arith.constant -5.000000e-01 : f32
    %1 = vector.broadcast %cst : f32 to vector<1024x128xf32>
    %2 = arith.maximumf %0, %1 : vector<1024x128xf32>
    %cst_1 = arith.constant 5.000000e-01 : f32
    %3 = vector.broadcast %cst_1 : f32 to vector<1024x128xf32>
    %4 = arith.minimumf %2, %3 : vector<1024x128xf32>
    %c0_2 = arith.constant 0 : index
    %c0_3 = arith.constant 0 : index
    %5 = vector.load %arg2[%c0_2, %c0_3] : memref<1024x128xf32, #tpu.memory_space<vmem>>, vector<1024x128xf32>
    tpu.vector_store %arg2[%c0_2, %c0_3], %4 {strides = array<i32>} : memref<1024x128xf32, #tpu.memory_space<vmem>>, vector<1024x128xf32>,
    return
  }
  func.func @transform_0(%arg0: i32) -> (i32, i32) {
    %c0_i32 = arith.constant 0 : i32
    %c0_i32_0 = arith.constant 0 : i32
    return %arg0, %c0_i32 : i32, i32
  }
  func.func @transform_1(%arg0: i32) -> (i32, i32) {
    %c0_i32 = arith.constant 0 : i32
    %c0_i32_0 = arith.constant 0 : i32
    return %arg0, %c0_i32 : i32, i32
  }
}

</mosaic_0001>

<llo_original>
// kernel: tpu_custom_call.1
$region0: #{tpu_custom_call.1}
  #allocation0 [shape = 'u32[]', space=smem, size = 0x4, offset = 0x4, fixed_abs, tag = 'smem constant byte address 0x4 - core index']
  #allocation1 [shape = 'u32[144,128]{1,0:T(1,128)}', space=vmem, size = 0x12000, scoped, tag = 'internal scratch']
  %s0 = inlined_call_operand.hbm [shape: f32[4096,128], index: 0, kind: input, shape index: {}]
  %s1 = inlined_call_operand.hbm [shape: f32[4096,128], index: 1, kind: output, shape index: {}]
  %s2 = sld [smem:[#allocation0]]
  $region41: #{tpu_custom_call.1} parent=0
    _
  %s4 = ssub.s32 1, %s2
  %s5 = scalar_select 0, %s4, %s2
  $region1: #{tpu_custom_call.1} parent=0
    #allocation2 [shape = 'u8[1048576]{0}', space=vmem, size = 0x100000, scoped, tag = 'input window, operand 0']
    #allocation3 [shape = 's32[2]{0}', space=sflag, size = 0x8, scoped, tag = 'scoped memory for tpu_custom_call.1']
    #allocation4 [shape = 's32[2]{0}', space=sflag, size = 0x8, scoped, tag = 'scoped memory for tpu_custom_call.1']
    #allocation5 [shape = 'u8[1048576]{0}', space=vmem, size = 0x100000, scoped, tag = 'output window, operand 0']
    %6 = vsyncpa [#allocation3], 0
    %s7 = scalar_lea.sflag [#allocation3], 1
    %8 = vsyncpa %s7, 0
    %9 = vsyncpa [#allocation4], 0
    %s10 = scalar_lea.sflag [#allocation4], 1
    %11 = vsyncpa %s10, 0
    loop: start=0, step=1, limit=6
    $region2: #{tpu_custom_call.1} parent=1 // loop_pre_header
      _
    $region3: #{tpu_custom_call.1} parent=1 // loop_header
      %s13 = sphi 0, %s17
      %p14 = scmp.ge.s32.totalorder %s13, 6
      %s23 = sphi 0, %s25
      %s26 = sphi 0, %s23
      %s27 = sphi 0, %s26
      %s43 = sphi 0, %s27
      %s49 = sphi 0, %s51
      %s52 = sphi 0, %s49
      %s53 = sphi 0, %s52
      %s69 = sphi 0, %s53
    $region4: #{tpu_custom_call.1} parent=1 // loop_header_branch
      %16 = sbr.rel (%p14) target = $region8
    $region5: #{tpu_custom_call.1} parent=1 // loop_body
      %s18 = ssub.s32 %s13, 1
      %s19 = ssub.s32 %s13, 2
      %s20 = sadd.s32 %s13, 1
      %s21 = ssub.s32 %s13, %s20
      %p22 = scmp.eq.s32.totalorder %s21, 0
      %s24 = sadd.s32 %s23, 1
      %s25 = scalar_select %p22, %s23, %s24
      %p28 = pneg %p22
      %p29 = scmp.eq.s32.totalorder %s13, 3
      %p30 = por %p28, %p29
      %p31 = scmp.ne.s32.totalorder %s23, %s26
      %p32 = scmp.eq.s32.totalorder %s13, 0
      %p33 = por %p31, %p32
      %p34 = scmp.ne.s32.totalorder %s23, %s26
      %p35 = scmp.eq.s32.totalorder %s18, 3
      %p36 = por %p34, %p35
      %p37 = scmp.ne.s32.totalorder %s26, %s27
      %p38 = scmp.eq.s32.totalorder %s18, 0
      %p39 = por %p37, %p38
      %p40 = scmp.ne.s32.totalorder %s26, %s27
      %p41 = scmp.eq.s32.totalorder %s19, 3
      %p42 = por %p40, %p41
      %p44 = scmp.ne.s32.totalorder %s27, %s43
      %p45 = scmp.eq.s32.totalorder %s19, 0
      %p46 = por %p44, %p45
      %s47 = ssub.s32 %s13, %s20
      %p48 = scmp.eq.s32.totalorder %s47, 0
      %s50 = sadd.s32 %s49, 1
      %s51 = scalar_select %p48, %s49, %s50
      %p54 = pneg %p48
      %p55 = scmp.eq.s32.totalorder %s13, 3
      %p56 = por %p54, %p55
      %p57 = scmp.ne.s32.totalorder %s49, %s52
      %p58 = scmp.eq.s32.totalorder %s13, 0
      %p59 = por %p57, %p58
      %p60 = scmp.ne.s32.totalorder %s49, %s52
      %p61 = scmp.eq.s32.totalorder %s18, 3
      %p62 = por %p60, %p61
      %p63 = scmp.ne.s32.totalorder %s52, %s53
      %p64 = scmp.eq.s32.totalorder %s18, 0
      %p65 = por %p63, %p64
      %p66 = scmp.ne.s32.totalorder %s52, %s53
      %p67 = scmp.eq.s32.totalorder %s19, 3
      %p68 = por %p66, %p67
      %p70 = scmp.ne.s32.totalorder %s53, %s69
      %p71 = scmp.eq.s32.totalorder %s19, 0
      %p72 = por %p70, %p71
      %p73 = scmp.le.s32.totalorder 1, %s13
      %p74 = scmp.lt.s32.totalorder %s13, 5
      %p75 = pnand %p73, %p74
      %p76 = pneg %p75
      // Predicated region
      $region9: #{tpu_custom_call.1} parent=5 // pred_check
        _
      $region10: #{tpu_custom_call.1} parent=5 // pred_check_branch
        %78 = sbr.rel (%p75) target = $region12
      $region11: #{tpu_custom_call.1} parent=5 // pred_region
        %s79 = ssub.s32 %s13, 1
      $region12: #{tpu_custom_call.1} parent=5 // pred_fallthru
        _
      %p80 = scmp.lt.s32.totalorder %s13, 4
      // Predicated region
      $region13: #{tpu_custom_call.1} parent=5 // pred_check
        %p81 = pneg %p80
      $region14: #{tpu_custom_call.1} parent=5 // pred_check_branch
        %83 = sbr.rel (%p81) target = $region16
      $region15: #{tpu_custom_call.1} parent=5 // pred_region
        // Predicated region
        $region17: #{tpu_custom_call.1} parent=15 // pred_check
          %p84 = pneg %p33
        $region18: #{tpu_custom_call.1} parent=15 // pred_check_branch
          %86 = sbr.rel (%p84) target = $region20
        $region19: #{tpu_custom_call.1} parent=15 // pred_region
          %s87 = sand.u32 %s23, 1
          %s88 = scalar_lea.sflag [#allocation3], %s87
          %s89 = sand.u32 %s23, 1
          %s90 = smul.addr %s89, 1024
          %s91 = scalar_lea.vmem [#allocation2], %s90
          %s92 = smul.u32 128, %s13
          %s94 = ssub.s32 16384, 16384
          %95 = vsyncadd %s88, %s94
          %s96 = smul.addr %s92, 128
          %s97 = scalar_lea.hbm %s0, %s96
          %s98 = sshll.u32 %s91, 4
          %s99 = int_to_ptr.vmem [resolvable:$true] %s98
          %104 = dma.hbm_to_vmem [thread:$0]  %s97, 16384, %s99, %s88, 128, 128, 8
        $region20: #{tpu_custom_call.1} parent=15 // pred_fallthru
          _
      $region16: #{tpu_custom_call.1} parent=5 // pred_fallthru
        _
      %p105 = scmp.le.s32.totalorder 1, %s13
      %p106 = scmp.lt.s32.totalorder %s13, 5
      %p107 = pnand %p105, %p106
      %p108 = pneg %p107
      // Predicated region
      $region21: #{tpu_custom_call.1} parent=5 // pred_check
        _
      $region22: #{tpu_custom_call.1} parent=5 // pred_check_branch
        %110 = sbr.rel (%p107) target = $region24
      $region23: #{tpu_custom_call.1} parent=5 // pred_region
        %s111 = ssub.s32 %s13, 1
        %s112 = sand.u32 %s26, 1
        %s113 = scalar_lea.sflag [#allocation3], %s112
        %s114 = sand.u32 %s26, 1
        %s115 = smul.addr %s114, 1024
        %s116 = scalar_lea.vmem [#allocation2], %s115
        // Predicated region
        $region25: #{tpu_custom_call.1} parent=23 // pred_check
          %p117 = pneg %p39
        $region26: #{tpu_custom_call.1} parent=23 // pred_check_branch
          %119 = sbr.rel (%p117) target = $region28
        $region27: #{tpu_custom_call.1} parent=23 // pred_region
          %120 = dma.done %s113, 16384
        $region28: #{tpu_custom_call.1} parent=23 // pred_fallthru
          _
        %s121 = sand.u32 %s26, 1
        %s122 = scalar_lea.sflag [#allocation3], %s121
        %s123 = sand.u32 %s26, 1
        %s124 = smul.addr %s123, 1024
        %s125 = scalar_lea.vmem [#allocation2], %s124
        %p126 = pneg %p39
        %p127 = pneg %p36
        %p128 = pneg %p65
        %p129 = pneg %p62
        %s130 = sand.u32 %s52, 1
        %s131 = scalar_lea.sflag [#allocation4], %s130
        %s132 = sand.u32 %s52, 1
        %s133 = smul.addr %s132, 1024
        %s134 = scalar_lea.vmem [#allocation5], %s133
        %s135 = smul.u32 128, %s18
        %s136 = smul.u32 128, %s18
        %v137 = vld [vmem:[%s116] sm:$0xff]
        %v138 = vld [vmem:[%s116 + $0x8] sm:$0xff]
        %v139 = vld [vmem:[%s116 + $0x10] sm:$0xff]
        %v140 = vld [vmem:[%s116 + $0x18] sm:$0xff]
        %v141 = vld [vmem:[%s116 + $0x20] sm:$0xff]
        %v142 = vld [vmem:[%s116 + $0x28] sm:$0xff]
        %v143 = vld [vmem:[%s116 + $0x30] sm:$0xff]
        %v144 = vld [vmem:[%s116 + $0x38] sm:$0xff]
        %v145 = vld [vmem:[%s116 + $0x40] sm:$0xff]
        %v146 = vld [vmem:[%s116 + $0x48] sm:$0xff]
        %v147 = vld [vmem:[%s116 + $0x50] sm:$0xff]
        %v148 = vld [vmem:[%s116 + $0x58] sm:$0xff]
        %v149 = vld [vmem:[%s116 + $0x60] sm:$0xff]
        %v150 = vld [vmem:[%s116 + $0x68] sm:$0xff]
        %v151 = vld [vmem:[%s116 + $0x70] sm:$0xff]
        %v152 = vld [vmem:[%s116 + $0x78] sm:$0xff]
        %v153 = vld [vmem:[%s116 + $0x80] sm:$0xff]
        %v154 = vld [vmem:[%s116 + $0x88] sm:$0xff]
        %v155 = vld [vmem:[%s116 + $0x90] sm:$0xff]
        %v156 = vld [vmem:[%s116 + $0x98] sm:$0xff]
        %v157 = vld [vmem:[%s116 + $0xa0] sm:$0xff]
        %v158 = vld [vmem:[%s116 + $0xa8] sm:$0xff]
        %v159 = vld [vmem:[%s116 + $0xb0] sm:$0xff]
        %v160 = vld [vmem:[%s116 + $0xb8] sm:$0xff]
        %v161 = vld [vmem:[%s116 + $0xc0] sm:$0xff]
        %v162 = vld [vmem:[%s116 + $0xc8] sm:$0xff]
        %v163 = vld [vmem:[%s116 + $0xd0] sm:$0xff]
        %v164 = vld [vmem:[%s116 + $0xd8] sm:$0xff]
        %v165 = vld [vmem:[%s116 + $0xe0] sm:$0xff]
        %v166 = vld [vmem:[%s116 + $0xe8] sm:$0xff]
        %v167 = vld [vmem:[%s116 + $0xf0] sm:$0xff]
        %v168 = vld [vmem:[%s116 + $0xf8] sm:$0xff]
        %v169 = vld [vmem:[%s116 + $0x100] sm:$0xff]
        %v170 = vld [vmem:[%s116 + $0x108] sm:$0xff]
        %v171 = vld [vmem:[%s116 + $0x110] sm:$0xff]
        %v172 = vld [vmem:[%s116 + $0x118] sm:$0xff]
        %v173 = vld [vmem:[%s116 + $0x120] sm:$0xff]
        %v174 = vld [vmem:[%s116 + $0x128] sm:$0xff]
        %v175 = vld [vmem:[%s116 + $0x130] sm:$0xff]
        %v176 = vld [vmem:[%s116 + $0x138] sm:$0xff]
        %v177 = vld [vmem:[%s116 + $0x140] sm:$0xff]
        %v178 = vld [vmem:[%s116 + $0x148] sm:$0xff]
        %v179 = vld [vmem:[%s116 + $0x150] sm:$0xff]
        %v180 = vld [vmem:[%s116 + $0x158] sm:$0xff]
        %v181 = vld [vmem:[%s116 + $0x160] sm:$0xff]
        %v182 = vld [vmem:[%s116 + $0x168] sm:$0xff]
        %v183 = vld [vmem:[%s116 + $0x170] sm:$0xff]
        %v184 = vld [vmem:[%s116 + $0x178] sm:$0xff]
        %v185 = vld [vmem:[%s116 + $0x180] sm:$0xff]
        %v186 = vld [vmem:[%s116 + $0x188] sm:$0xff]
        %v187 = vld [vmem:[%s116 + $0x190] sm:$0xff]
        %v188 = vld [vmem:[%s116 + $0x198] sm:$0xff]
        %v189 = vld [vmem:[%s116 + $0x1a0] sm:$0xff]
        %v190 = vld [vmem:[%s116 + $0x1a8] sm:$0xff]
        %v191 = vld [vmem:[%s116 + $0x1b0] sm:$0xff]
        %v192 = vld [vmem:[%s116 + $0x1b8] sm:$0xff]
        %v193 = vld [vmem:[%s116 + $0x1c0] sm:$0xff]
        %v194 = vld [vmem:[%s116 + $0x1c8] sm:$0xff]
        %v195 = vld [vmem:[%s116 + $0x1d0] sm:$0xff]
        %v196 = vld [vmem:[%s116 + $0x1d8] sm:$0xff]
        %v197 = vld [vmem:[%s116 + $0x1e0] sm:$0xff]
        %v198 = vld [vmem:[%s116 + $0x1e8] sm:$0xff]
        %v199 = vld [vmem:[%s116 + $0x1f0] sm:$0xff]
        %v200 = vld [vmem:[%s116 + $0x1f8] sm:$0xff]
        %v201 = vld [vmem:[%s116 + $0x200] sm:$0xff]
        %v202 = vld [vmem:[%s116 + $0x208] sm:$0xff]
        %v203 = vld [vmem:[%s116 + $0x210] sm:$0xff]
        %v204 = vld [vmem:[%s116 + $0x218] sm:$0xff]
        %v205 = vld [vmem:[%s116 + $0x220] sm:$0xff]
        %v206 = vld [vmem:[%s116 + $0x228] sm:$0xff]
        %v207 = vld [vmem:[%s116 + $0x230] sm:$0xff]
        %v208 = vld [vmem:[%s116 + $0x238] sm:$0xff]
        %v209 = vld [vmem:[%s116 + $0x240] sm:$0xff]
        %v210 = vld [vmem:[%s116 + $0x248] sm:$0xff]
        %v211 = vld [vmem:[%s116 + $0x250] sm:$0xff]
        %v212 = vld [vmem:[%s116 + $0x258] sm:$0xff]
        %v213 = vld [vmem:[%s116 + $0x260] sm:$0xff]
        %v214 = vld [vmem:[%s116 + $0x268] sm:$0xff]
        %v215 = vld [vmem:[%s116 + $0x270] sm:$0xff]
        %v216 = vld [vmem:[%s116 + $0x278] sm:$0xff]
        %v217 = vld [vmem:[%s116 + $0x280] sm:$0xff]
        %v218 = vld [vmem:[%s116 + $0x288] sm:$0xff]
        %v219 = vld [vmem:[%s116 + $0x290] sm:$0xff]
        %v220 = vld [vmem:[%s116 + $0x298] sm:$0xff]
        %v221 = vld [vmem:[%s116 + $0x2a0] sm:$0xff]
        %v222 = vld [vmem:[%s116 + $0x2a8] sm:$0xff]
        %v223 = vld [vmem:[%s116 + $0x2b0] sm:$0xff]
        %v224 = vld [vmem:[%s116 + $0x2b8] sm:$0xff]
        %v225 = vld [vmem:[%s116 + $0x2c0] sm:$0xff]
        %v226 = vld [vmem:[%s116 + $0x2c8] sm:$0xff]
        %v227 = vld [vmem:[%s116 + $0x2d0] sm:$0xff]
        %v228 = vld [vmem:[%s116 + $0x2d8] sm:$0xff]
        %v229 = vld [vmem:[%s116 + $0x2e0] sm:$0xff]
        %v230 = vld [vmem:[%s116 + $0x2e8] sm:$0xff]
        %v231 = vld [vmem:[%s116 + $0x2f0] sm:$0xff]
        %v232 = vld [vmem:[%s116 + $0x2f8] sm:$0xff]
        %v233 = vld [vmem:[%s116 + $0x300] sm:$0xff]
        %v234 = vld [vmem:[%s116 + $0x308] sm:$0xff]
        %v235 = vld [vmem:[%s116 + $0x310] sm:$0xff]
        %v236 = vld [vmem:[%s116 + $0x318] sm:$0xff]
        %v237 = vld [vmem:[%s116 + $0x320] sm:$0xff]
        %v238 = vld [vmem:[%s116 + $0x328] sm:$0xff]
        %v239 = vld [vmem:[%s116 + $0x330] sm:$0xff]
        %v240 = vld [vmem:[%s116 + $0x338] sm:$0xff]
        %v241 = vld [vmem:[%s116 + $0x340] sm:$0xff]
        %v242 = vld [vmem:[%s116 + $0x348] sm:$0xff]
        %v243 = vld [vmem:[%s116 + $0x350] sm:$0xff]
        %v244 = vld [vmem:[%s116 + $0x358] sm:$0xff]
        %v245 = vld [vmem:[%s116 + $0x360] sm:$0xff]
        %v246 = vld [vmem:[%s116 + $0x368] sm:$0xff]
        %v247 = vld [vmem:[%s116 + $0x370] sm:$0xff]
        %v248 = vld [vmem:[%s116 + $0x378] sm:$0xff]
        %v249 = vld [vmem:[%s116 + $0x380] sm:$0xff]
        %v250 = vld [vmem:[%s116 + $0x388] sm:$0xff]
        %v251 = vld [vmem:[%s116 + $0x390] sm:$0xff]
        %v252 = vld [vmem:[%s116 + $0x398] sm:$0xff]
        %v253 = vld [vmem:[%s116 + $0x3a0] sm:$0xff]
        %v254 = vld [vmem:[%s116 + $0x3a8] sm:$0xff]
        %v255 = vld [vmem:[%s116 + $0x3b0] sm:$0xff]
        %v256 = vld [vmem:[%s116 + $0x3b8] sm:$0xff]
        %v257 = vld [vmem:[%s116 + $0x3c0] sm:$0xff]
        %v258 = vld [vmem:[%s116 + $0x3c8] sm:$0xff]
        %v259 = vld [vmem:[%s116 + $0x3d0] sm:$0xff]
        %v260 = vld [vmem:[%s116 + $0x3d8] sm:$0xff]
        %v261 = vld [vmem:[%s116 + $0x3e0] sm:$0xff]
        %v262 = vld [vmem:[%s116 + $0x3e8] sm:$0xff]
        %v263 = vld [vmem:[%s116 + $0x3f0] sm:$0xff]
        %v264 = vld [vmem:[%s116 + $0x3f8] sm:$0xff]
        %v265 = vmax.f32 %v137, -0.5
        %v266 = vmax.f32 %v138, -0.5
        %v267 = vmax.f32 %v139, -0.5
        %v268 = vmax.f32 %v140, -0.5
        %v269 = vmax.f32 %v141, -0.5
        %v270 = vmax.f32 %v142, -0.5
        %v271 = vmax.f32 %v143, -0.5
        %v272 = vmax.f32 %v144, -0.5
        %v273 = vmax.f32 %v145, -0.5
        %v274 = vmax.f32 %v146, -0.5
        %v275 = vmax.f32 %v147, -0.5
        %v276 = vmax.f32 %v148, -0.5
        %v277 = vmax.f32 %v149, -0.5
        %v278 = vmax.f32 %v150, -0.5
        %v279 = vmax.f32 %v151, -0.5
        %v280 = vmax.f32 %v152, -0.5
        %v281 = vmax.f32 %v153, -0.5
        %v282 = vmax.f32 %v154, -0.5
        %v283 = vmax.f32 %v155, -0.5
        %v284 = vmax.f32 %v156, -0.5
        %v285 = vmax.f32 %v157, -0.5
        %v286 = vmax.f32 %v158, -0.5
        %v287 = vmax.f32 %v159, -0.5
        %v288 = vmax.f32 %v160, -0.5
        %v289 = vmax.f32 %v161, -0.5
        %v290 = vmax.f32 %v162, -0.5
        %v291 = vmax.f32 %v163, -0.5
        %v292 = vmax.f32 %v164, -0.5
        %v293 = vmax.f32 %v165, -0.5
        %v294 = vmax.f32 %v166, -0.5
        %v295 = vmax.f32 %v167, -0.5
        %v296 = vmax.f32 %v168, -0.5
        %v297 = vmax.f32 %v169, -0.5
        %v298 = vmax.f32 %v170, -0.5
        %v299 = vmax.f32 %v171, -0.5
        %v300 = vmax.f32 %v172, -0.5
        %v301 = vmax.f32 %v173, -0.5
        %v302 = vmax.f32 %v174, -0.5
        %v303 = vmax.f32 %v175, -0.5
        %v304 = vmax.f32 %v176, -0.5
        %v305 = vmax.f32 %v177, -0.5
        %v306 = vmax.f32 %v178, -0.5
        %v307 = vmax.f32 %v179, -0.5
        %v308 = vmax.f32 %v180, -0.5
        %v309 = vmax.f32 %v181, -0.5
        %v310 = vmax.f32 %v182, -0.5
        %v311 = vmax.f32 %v183, -0.5
        %v312 = vmax.f32 %v184, -0.5
        %v313 = vmax.f32 %v185, -0.5
        %v314 = vmax.f32 %v186, -0.5
        %v315 = vmax.f32 %v187, -0.5
        %v316 = vmax.f32 %v188, -0.5
        %v317 = vmax.f32 %v189, -0.5
        %v318 = vmax.f32 %v190, -0.5
        %v319 = vmax.f32 %v191, -0.5
        %v320 = vmax.f32 %v192, -0.5
        %v321 = vmax.f32 %v193, -0.5
        %v322 = vmax.f32 %v194, -0.5
        %v323 = vmax.f32 %v195, -0.5
        %v324 = vmax.f32 %v196, -0.5
        %v325 = vmax.f32 %v197, -0.5
        %v326 = vmax.f32 %v198, -0.5
        %v327 = vmax.f32 %v199, -0.5
        %v328 = vmax.f32 %v200, -0.5
        %v329 = vmax.f32 %v201, -0.5
        %v330 = vmax.f32 %v202, -0.5
        %v331 = vmax.f32 %v203, -0.5
        %v332 = vmax.f32 %v204, -0.5
        %v333 = vmax.f32 %v205, -0.5
        %v334 = vmax.f32 %v206, -0.5
        %v335 = vmax.f32 %v207, -0.5
        %v336 = vmax.f32 %v208, -0.5
        %v337 = vmax.f32 %v209, -0.5
        %v338 = vmax.f32 %v210, -0.5
        %v339 = vmax.f32 %v211, -0.5
        %v340 = vmax.f32 %v212, -0.5
        %v341 = vmax.f32 %v213, -0.5
        %v342 = vmax.f32 %v214, -0.5
        %v343 = vmax.f32 %v215, -0.5
        %v344 = vmax.f32 %v216, -0.5
        %v345 = vmax.f32 %v217, -0.5
        %v346 = vmax.f32 %v218, -0.5
        %v347 = vmax.f32 %v219, -0.5
        %v348 = vmax.f32 %v220, -0.5
        %v349 = vmax.f32 %v221, -0.5
        %v350 = vmax.f32 %v222, -0.5
        %v351 = vmax.f32 %v223, -0.5
        %v352 = vmax.f32 %v224, -0.5
        %v353 = vmax.f32 %v225, -0.5
        %v354 = vmax.f32 %v226, -0.5
        %v355 = vmax.f32 %v227, -0.5
        %v356 = vmax.f32 %v228, -0.5
        %v357 = vmax.f32 %v229, -0.5
        %v358 = vmax.f32 %v230, -0.5
        %v359 = vmax.f32 %v231, -0.5
        %v360 = vmax.f32 %v232, -0.5
        %v361 = vmax.f32 %v233, -0.5
        %v362 = vmax.f32 %v234, -0.5
        %v363 = vmax.f32 %v235, -0.5
        %v364 = vmax.f32 %v236, -0.5
        %v365 = vmax.f32 %v237, -0.5
        %v366 = vmax.f32 %v238, -0.5
        %v367 = vmax.f32 %v239, -0.5
        %v368 = vmax.f32 %v240, -0.5
        %v369 = vmax.f32 %v241, -0.5
        %v370 = vmax.f32 %v242, -0.5
        %v371 = vmax.f32 %v243, -0.5
        %v372 = vmax.f32 %v244, -0.5
        %v373 = vmax.f32 %v245, -0.5
        %v374 = vmax.f32 %v246, -0.5
        %v375 = vmax.f32 %v247, -0.5
        %v376 = vmax.f32 %v248, -0.5
        %v377 = vmax.f32 %v249, -0.5
        %v378 = vmax.f32 %v250, -0.5
        %v379 = vmax.f32 %v251, -0.5
        %v380 = vmax.f32 %v252, -0.5
        %v381 = vmax.f32 %v253, -0.5
        %v382 = vmax.f32 %v254, -0.5
        %v383 = vmax.f32 %v255, -0.5
        %v384 = vmax.f32 %v256, -0.5
        %v385 = vmax.f32 %v257, -0.5
        %v386 = vmax.f32 %v258, -0.5
        %v387 = vmax.f32 %v259, -0.5
        %v388 = vmax.f32 %v260, -0.5
        %v389 = vmax.f32 %v261, -0.5
        %v390 = vmax.f32 %v262, -0.5
        %v391 = vmax.f32 %v263, -0.5
        %v392 = vmax.f32 %v264, -0.5
        %v393 = vmin.f32 %v265, 0.5
        %v394 = vmin.f32 %v266, 0.5
        %v395 = vmin.f32 %v267, 0.5
        %v396 = vmin.f32 %v268, 0.5
        %v397 = vmin.f32 %v269, 0.5
        %v398 = vmin.f32 %v270, 0.5
        %v399 = vmin.f32 %v271, 0.5
        %v400 = vmin.f32 %v272, 0.5
        %v401 = vmin.f32 %v273, 0.5
        %v402 = vmin.f32 %v274, 0.5
        %v403 = vmin.f32 %v275, 0.5
        %v404 = vmin.f32 %v276, 0.5
        %v405 = vmin.f32 %v277, 0.5
        %v406 = vmin.f32 %v278, 0.5
        %v407 = vmin.f32 %v279, 0.5
        %v408 = vmin.f32 %v280, 0.5
        %v409 = vmin.f32 %v281, 0.5
        %v410 = vmin.f32 %v282, 0.5
        %v411 = vmin.f32 %v283, 0.5
        %v412 = vmin.f32 %v284, 0.5
        %v413 = vmin.f32 %v285, 0.5
        %v414 = vmin.f32 %v286, 0.5
        %v415 = vmin.f32 %v287, 0.5
        %v416 = vmin.f32 %v288, 0.5
        %v417 = vmin.f32 %v289, 0.5
        %v418 = vmin.f32 %v290, 0.5
        %v419 = vmin.f32 %v291, 0.5
        %v420 = vmin.f32 %v292, 0.5
        %v421 = vmin.f32 %v293, 0.5
        %v422 = vmin.f32 %v294, 0.5
        %v423 = vmin.f32 %v295, 0.5
        %v424 = vmin.f32 %v296, 0.5
        %v425 = vmin.f32 %v297, 0.5
        %v426 = vmin.f32 %v298, 0.5
        %v427 = vmin.f32 %v299, 0.5
        %v428 = vmin.f32 %v300, 0.5
        %v429 = vmin.f32 %v301, 0.5
        %v430 = vmin.f32 %v302, 0.5
        %v431 = vmin.f32 %v303, 0.5
        %v432 = vmin.f32 %v304, 0.5
        %v433 = vmin.f32 %v305, 0.5
        %v434 = vmin.f32 %v306, 0.5
        %v435 = vmin.f32 %v307, 0.5
        %v436 = vmin.f32 %v308, 0.5
        %v437 = vmin.f32 %v309, 0.5
        %v438 = vmin.f32 %v310, 0.5
        %v439 = vmin.f32 %v311, 0.5
        %v440 = vmin.f32 %v312, 0.5
        %v441 = vmin.f32 %v313, 0.5
        %v442 = vmin.f32 %v314, 0.5
        %v443 = vmin.f32 %v315, 0.5
        %v444 = vmin.f32 %v316, 0.5
        %v445 = vmin.f32 %v317, 0.5
        %v446 = vmin.f32 %v318, 0.5
        %v447 = vmin.f32 %v319, 0.5
        %v448 = vmin.f32 %v320, 0.5
        %v449 = vmin.f32 %v321, 0.5
        %v450 = vmin.f32 %v322, 0.5
        %v451 = vmin.f32 %v323, 0.5
        %v452 = vmin.f32 %v324, 0.5
        %v453 = vmin.f32 %v325, 0.5
        %v454 = vmin.f32 %v326, 0.5
        %v455 = vmin.f32 %v327, 0.5
        %v456 = vmin.f32 %v328, 0.5
        %v457 = vmin.f32 %v329, 0.5
        %v458 = vmin.f32 %v330, 0.5
        %v459 = vmin.f32 %v331, 0.5
        %v460 = vmin.f32 %v332, 0.5
        %v461 = vmin.f32 %v333, 0.5
        %v462 = vmin.f32 %v334, 0.5
        %v463 = vmin.f32 %v335, 0.5
        %v464 = vmin.f32 %v336, 0.5
        %v465 = vmin.f32 %v337, 0.5
        %v466 = vmin.f32 %v338, 0.5
        %v467 = vmin.f32 %v339, 0.5
        %v468 = vmin.f32 %v340, 0.5
        %v469 = vmin.f32 %v341, 0.5
        %v470 = vmin.f32 %v342, 0.5
        %v471 = vmin.f32 %v343, 0.5
        %v472 = vmin.f32 %v344, 0.5
        %v473 = vmin.f32 %v345, 0.5
        %v474 = vmin.f32 %v346, 0.5
        %v475 = vmin.f32 %v347, 0.5
        %v476 = vmin.f32 %v348, 0.5
        %v477 = vmin.f32 %v349, 0.5
        %v478 = vmin.f32 %v350, 0.5
        %v479 = vmin.f32 %v351, 0.5
        %v480 = vmin.f32 %v352, 0.5
        %v481 = vmin.f32 %v353, 0.5
        %v482 = vmin.f32 %v354, 0.5
        %v483 = vmin.f32 %v355, 0.5
        %v484 = vmin.f32 %v356, 0.5
        %v485 = vmin.f32 %v357, 0.5
        %v486 = vmin.f32 %v358, 0.5
        %v487 = vmin.f32 %v359, 0.5
        %v488 = vmin.f32 %v360, 0.5
        %v489 = vmin.f32 %v361, 0.5
        %v490 = vmin.f32 %v362, 0.5
        %v491 = vmin.f32 %v363, 0.5
        %v492 = vmin.f32 %v364, 0.5
        %v493 = vmin.f32 %v365, 0.5
        %v494 = vmin.f32 %v366, 0.5
        %v495 = vmin.f32 %v367, 0.5
        %v496 = vmin.f32 %v368, 0.5
        %v497 = vmin.f32 %v369, 0.5
        %v498 = vmin.f32 %v370, 0.5
        %v499 = vmin.f32 %v371, 0.5
        %v500 = vmin.f32 %v372, 0.5
        %v501 = vmin.f32 %v373, 0.5
        %v502 = vmin.f32 %v374, 0.5
        %v503 = vmin.f32 %v375, 0.5
        %v504 = vmin.f32 %v376, 0.5
        %v505 = vmin.f32 %v377, 0.5
        %v506 = vmin.f32 %v378, 0.5
        %v507 = vmin.f32 %v379, 0.5
        %v508 = vmin.f32 %v380, 0.5
        %v509 = vmin.f32 %v381, 0.5
        %v510 = vmin.f32 %v382, 0.5
        %v511 = vmin.f32 %v383, 0.5
        %v512 = vmin.f32 %v384, 0.5
        %v513 = vmin.f32 %v385, 0.5
        %v514 = vmin.f32 %v386, 0.5
        %v515 = vmin.f32 %v387, 0.5
        %v516 = vmin.f32 %v388, 0.5
        %v517 = vmin.f32 %v389, 0.5
        %v518 = vmin.f32 %v390, 0.5
        %v519 = vmin.f32 %v391, 0.5
        %v520 = vmin.f32 %v392, 0.5
        %521 = vst [vmem:[%s134] sm:$0xff] %v393
        %522 = vst [vmem:[%s134 + $0x8] sm:$0xff] %v394
        %523 = vst [vmem:[%s134 + $0x10] sm:$0xff] %v395
        %524 = vst [vmem:[%s134 + $0x18] sm:$0xff] %v396
        %525 = vst [vmem:[%s134 + $0x20] sm:$0xff] %v397
        %526 = vst [vmem:[%s134 + $0x28] sm:$0xff] %v398
        %527 = vst [vmem:[%s134 + $0x30] sm:$0xff] %v399
        %528 = vst [vmem:[%s134 + $0x38] sm:$0xff] %v400
        %529 = vst [vmem:[%s134 + $0x40] sm:$0xff] %v401
        %530 = vst [vmem:[%s134 + $0x48] sm:$0xff] %v402
        %531 = vst [vmem:[%s134 + $0x50] sm:$0xff] %v403
        %532 = vst [vmem:[%s134 + $0x58] sm:$0xff] %v404
        %533 = vst [vmem:[%s134 + $0x60] sm:$0xff] %v405
        %534 = vst [vmem:[%s134 + $0x68] sm:$0xff] %v406
        %535 = vst [vmem:[%s134 + $0x70] sm:$0xff] %v407
        %536 = vst [vmem:[%s134 + $0x78] sm:$0xff] %v408
        %537 = vst [vmem:[%s134 + $0x80] sm:$0xff] %v409
        %538 = vst [vmem:[%s134 + $0x88] sm:$0xff] %v410
        %539 = vst [vmem:[%s134 + $0x90] sm:$0xff] %v411
        %540 = vst [vmem:[%s134 + $0x98] sm:$0xff] %v412
        %541 = vst [vmem:[%s134 + $0xa0] sm:$0xff] %v413
        %542 = vst [vmem:[%s134 + $0xa8] sm:$0xff] %v414
        %543 = vst [vmem:[%s134 + $0xb0] sm:$0xff] %v415
        %544 = vst [vmem:[%s134 + $0xb8] sm:$0xff] %v416
        %545 = vst [vmem:[%s134 + $0xc0] sm:$0xff] %v417
        %546 = vst [vmem:[%s134 + $0xc8] sm:$0xff] %v418
        %547 = vst [vmem:[%s134 + $0xd0] sm:$0xff] %v419
        %548 = vst [vmem:[%s134 + $0xd8] sm:$0xff] %v420
        %549 = vst [vmem:[%s134 + $0xe0] sm:$0xff] %v421
        %550 = vst [vmem:[%s134 + $0xe8] sm:$0xff] %v422
        %551 = vst [vmem:[%s134 + $0xf0] sm:$0xff] %v423
        %552 = vst [vmem:[%s134 + $0xf8] sm:$0xff] %v424
        %553 = vst [vmem:[%s134 + $0x100] sm:$0xff] %v425
        %554 = vst [vmem:[%s134 + $0x108] sm:$0xff] %v426
        %555 = vst [vmem:[%s134 + $0x110] sm:$0xff] %v427
        %556 = vst [vmem:[%s134 + $0x118] sm:$0xff] %v428
        %557 = vst [vmem:[%s134 + $0x120] sm:$0xff] %v429
        %558 = vst [vmem:[%s134 + $0x128] sm:$0xff] %v430
        %559 = vst [vmem:[%s134 + $0x130] sm:$0xff] %v431
        %560 = vst [vmem:[%s134 + $0x138] sm:$0xff] %v432
        %561 = vst [vmem:[%s134 + $0x140] sm:$0xff] %v433
        %562 = vst [vmem:[%s134 + $0x148] sm:$0xff] %v434
        %563 = vst [vmem:[%s134 + $0x150] sm:$0xff] %v435
        %564 = vst [vmem:[%s134 + $0x158] sm:$0xff] %v436
        %565 = vst [vmem:[%s134 + $0x160] sm:$0xff] %v437
        %566 = vst [vmem:[%s134 + $0x168] sm:$0xff] %v438
        %567 = vst [vmem:[%s134 + $0x170] sm:$0xff] %v439
        %568 = vst [vmem:[%s134 + $0x178] sm:$0xff] %v440
        %569 = vst [vmem:[%s134 + $0x180] sm:$0xff] %v441
        %570 = vst [vmem:[%s134 + $0x188] sm:$0xff] %v442
        %571 = vst [vmem:[%s134 + $0x190] sm:$0xff] %v443
        %572 = vst [vmem:[%s134 + $0x198] sm:$0xff] %v444
        %573 = vst [vmem:[%s134 + $0x1a0] sm:$0xff] %v445
        %574 = vst [vmem:[%s134 + $0x1a8] sm:$0xff] %v446
        %575 = vst [vmem:[%s134 + $0x1b0] sm:$0xff] %v447
        %576 = vst [vmem:[%s134 + $0x1b8] sm:$0xff] %v448
        %577 = vst [vmem:[%s134 + $0x1c0] sm:$0xff] %v449
        %578 = vst [vmem:[%s134 + $0x1c8] sm:$0xff] %v450
        %579 = vst [vmem:[%s134 + $0x1d0] sm:$0xff] %v451
        %580 = vst [vmem:[%s134 + $0x1d8] sm:$0xff] %v452
        %581 = vst [vmem:[%s134 + $0x1e0] sm:$0xff] %v453
        %582 = vst [vmem:[%s134 + $0x1e8] sm:$0xff] %v454
        %583 = vst [vmem:[%s134 + $0x1f0] sm:$0xff] %v455
        %584 = vst [vmem:[%s134 + $0x1f8] sm:$0xff] %v456
        %585 = vst [vmem:[%s134 + $0x200] sm:$0xff] %v457
        %586 = vst [vmem:[%s134 + $0x208] sm:$0xff] %v458
        %587 = vst [vmem:[%s134 + $0x210] sm:$0xff] %v459
        %588 = vst [vmem:[%s134 + $0x218] sm:$0xff] %v460
        %589 = vst [vmem:[%s134 + $0x220] sm:$0xff] %v461
        %590 = vst [vmem:[%s134 + $0x228] sm:$0xff] %v462
        %591 = vst [vmem:[%s134 + $0x230] sm:$0xff] %v463
        %592 = vst [vmem:[%s134 + $0x238] sm:$0xff] %v464
        %593 = vst [vmem:[%s134 + $0x240] sm:$0xff] %v465
        %594 = vst [vmem:[%s134 + $0x248] sm:$0xff] %v466
        %595 = vst [vmem:[%s134 + $0x250] sm:$0xff] %v467
        %596 = vst [vmem:[%s134 + $0x258] sm:$0xff] %v468
        %597 = vst [vmem:[%s134 + $0x260] sm:$0xff] %v469
        %598 = vst [vmem:[%s134 + $0x268] sm:$0xff] %v470
        %599 = vst [vmem:[%s134 + $0x270] sm:$0xff] %v471
        %600 = vst [vmem:[%s134 + $0x278] sm:$0xff] %v472
        %601 = vst [vmem:[%s134 + $0x280] sm:$0xff] %v473
        %602 = vst [vmem:[%s134 + $0x288] sm:$0xff] %v474
        %603 = vst [vmem:[%s134 + $0x290] sm:$0xff] %v475
        %604 = vst [vmem:[%s134 + $0x298] sm:$0xff] %v476
        %605 = vst [vmem:[%s134 + $0x2a0] sm:$0xff] %v477
        %606 = vst [vmem:[%s134 + $0x2a8] sm:$0xff] %v478
        %607 = vst [vmem:[%s134 + $0x2b0] sm:$0xff] %v479
        %608 = vst [vmem:[%s134 + $0x2b8] sm:$0xff] %v480
        %609 = vst [vmem:[%s134 + $0x2c0] sm:$0xff] %v481
        %610 = vst [vmem:[%s134 + $0x2c8] sm:$0xff] %v482
        %611 = vst [vmem:[%s134 + $0x2d0] sm:$0xff] %v483
        %612 = vst [vmem:[%s134 + $0x2d8] sm:$0xff] %v484
        %613 = vst [vmem:[%s134 + $0x2e0] sm:$0xff] %v485
        %614 = vst [vmem:[%s134 + $0x2e8] sm:$0xff] %v486
        %615 = vst [vmem:[%s134 + $0x2f0] sm:$0xff] %v487
        %616 = vst [vmem:[%s134 + $0x2f8] sm:$0xff] %v488
        %617 = vst [vmem:[%s134 + $0x300] sm:$0xff] %v489
        %618 = vst [vmem:[%s134 + $0x308] sm:$0xff] %v490
        %619 = vst [vmem:[%s134 + $0x310] sm:$0xff] %v491
        %620 = vst [vmem:[%s134 + $0x318] sm:$0xff] %v492
        %621 = vst [vmem:[%s134 + $0x320] sm:$0xff] %v493
        %622 = vst [vmem:[%s134 + $0x328] sm:$0xff] %v494
        %623 = vst [vmem:[%s134 + $0x330] sm:$0xff] %v495
        %624 = vst [vmem:[%s134 + $0x338] sm:$0xff] %v496
        %625 = vst [vmem:[%s134 + $0x340] sm:$0xff] %v497
        %626 = vst [vmem:[%s134 + $0x348] sm:$0xff] %v498
        %627 = vst [vmem:[%s134 + $0x350] sm:$0xff] %v499
        %628 = vst [vmem:[%s134 + $0x358] sm:$0xff] %v500
        %629 = vst [vmem:[%s134 + $0x360] sm:$0xff] %v501
        %630 = vst [vmem:[%s134 + $0x368] sm:$0xff] %v502
        %631 = vst [vmem:[%s134 + $0x370] sm:$0xff] %v503
        %632 = vst [vmem:[%s134 + $0x378] sm:$0xff] %v504
        %633 = vst [vmem:[%s134 + $0x380] sm:$0xff] %v505
        %634 = vst [vmem:[%s134 + $0x388] sm:$0xff] %v506
        %635 = vst [vmem:[%s134 + $0x390] sm:$0xff] %v507
        %636 = vst [vmem:[%s134 + $0x398] sm:$0xff] %v508
        %637 = vst [vmem:[%s134 + $0x3a0] sm:$0xff] %v509
        %638 = vst [vmem:[%s134 + $0x3a8] sm:$0xff] %v510
        %639 = vst [vmem:[%s134 + $0x3b0] sm:$0xff] %v511
        %640 = vst [vmem:[%s134 + $0x3b8] sm:$0xff] %v512
        %641 = vst [vmem:[%s134 + $0x3c0] sm:$0xff] %v513
        %642 = vst [vmem:[%s134 + $0x3c8] sm:$0xff] %v514
        %643 = vst [vmem:[%s134 + $0x3d0] sm:$0xff] %v515
        %644 = vst [vmem:[%s134 + $0x3d8] sm:$0xff] %v516
        %645 = vst [vmem:[%s134 + $0x3e0] sm:$0xff] %v517
        %646 = vst [vmem:[%s134 + $0x3e8] sm:$0xff] %v518
        %647 = vst [vmem:[%s134 + $0x3f0] sm:$0xff] %v519
        %648 = vst [vmem:[%s134 + $0x3f8] sm:$0xff] %v520
        %s649 = sand.u32 %s52, 1
        %s650 = scalar_lea.sflag [#allocation4], %s649
        %s651 = sand.u32 %s52, 1
        %s652 = smul.addr %s651, 1024
        %s653 = scalar_lea.vmem [#allocation5], %s652
        // Predicated region
        $region29: #{tpu_custom_call.1} parent=23 // pred_check
          %p654 = pneg %p62
        $region30: #{tpu_custom_call.1} parent=23 // pred_check_branch
          %656 = sbr.rel (%p654) target = $region32
        $region31: #{tpu_custom_call.1} parent=23 // pred_region
          %s657 = smul.u32 128, %s18
          %s659 = ssub.s32 16384, 16384
          %660 = vsyncadd %s650, %s659
          %s661 = smul.addr %s657, 128
          %s662 = scalar_lea.hbm %s1, %s661
          %s663 = sshll.u32 %s653, 4
          %s664 = int_to_ptr.vmem [resolvable:$true] %s663
          %669 = dma.vmem_to_hbm [thread:$0]  %s664, 16384, %s662, %s650, 128, 128, 8
        $region32: #{tpu_custom_call.1} parent=23 // pred_fallthru
          _
      $region24: #{tpu_custom_call.1} parent=5 // pred_fallthru
        _
      %p670 = scmp.le.s32.totalorder 2, %s13
      // Predicated region
      $region33: #{tpu_custom_call.1} parent=5 // pred_check
        %p671 = pneg %p670
      $region34: #{tpu_custom_call.1} parent=5 // pred_check_branch
        %673 = sbr.rel (%p671) target = $region36
      $region35: #{tpu_custom_call.1} parent=5 // pred_region
        %s674 = ssub.s32 %s13, 2
        // Predicated region
        $region37: #{tpu_custom_call.1} parent=35 // pred_check
          %p675 = pneg %p68
        $region38: #{tpu_custom_call.1} parent=35 // pred_check_branch
          %677 = sbr.rel (%p675) target = $region40
        $region39: #{tpu_custom_call.1} parent=35 // pred_region
          %s678 = sand.u32 %s53, 1
          %s679 = scalar_lea.sflag [#allocation4], %s678
          %s680 = sand.u32 %s53, 1
          %s681 = smul.addr %s680, 1024
          %s682 = scalar_lea.vmem [#allocation5], %s681
          %683 = dma.done %s679, 16384
        $region40: #{tpu_custom_call.1} parent=35 // pred_fallthru
          _
      $region36: #{tpu_custom_call.1} parent=5 // pred_fallthru
        _
    $region6: #{tpu_custom_call.1} parent=1 // loop_footer
      %s17 = sadd.s32 1, %s13
    $region7: #{tpu_custom_call.1} parent=1 // loop_footer_branch
      %12 = sbr.rel target = $region3
    $region8: #{tpu_custom_call.1} parent=1 // loop_exit
      _
    %684 = vsyncpa [#allocation3], 1
    %s685 = scalar_lea.sflag [#allocation3], 1
    %686 = vsyncpa %s685, 1
    %687 = vsyncpa [#allocation4], 1
    %s688 = scalar_lea.sflag [#allocation4], 1
    %689 = vsyncpa %s688, 1

</llo_original>
